<compile_context>
chip_gen: v5e
topology: v5e:2x2
jax: 0.10.0
libtpu: 0.0.40
codegen_flags: <defaults>
</compile_context>

<pallas_src>
import functools

import jax
import jax.numpy as jnp
import numpy as np
from jax.experimental import pallas as pl
from jax.experimental.pallas import tpu as pltpu


def _bottleneck_kernel(x_ref, m_ref, s1_ref, b1_ref, w1_ref, s2_ref, b2_ref,
                       w2_ref, out_ref, *, width):
    # x_ref  : (B_blk, Cin, S)       S = H*W flattened spatial (lane axis)
    # m_ref  : (9, S)                per-tap zero-padding masks (f32 0/1)
    # s1/b1  : (Cin, 1)              folded BN1 scale / shift
    # w1_ref : (Cint, Cin)           1x1 conv weight
    # s2/b2  : (Cint, 1)             folded BN2 scale / shift
    # w2_ref : (Cout, 9*Cint)        3x3 conv taps packed (dy, dx, ci) -> column
    # out_ref: (B_blk, Cin+Cout, S)  fused [x | conv_out]
    B, Cin, S = x_ref.shape
    Cout = w2_ref.shape[0]

    w1 = w1_ref[...]
    w2 = w2_ref[...]
    s1 = s1_ref[...]
    b1 = b1_ref[...]
    s2 = s2_ref[...]
    b2 = b2_ref[...]
    masks = m_ref[...]

    for b in range(B):                      # B_blk is small & static -> unrolled
        xb = x_ref[b]                                         # (Cin, S)

        # ---- BN1 + ReLU (folded scale/shift), full-lane VPU ----
        h1 = jnp.maximum(xb * s1 + b1, 0.0)

        # ---- 1x1 conv: one MXU dot, spatial stays on lanes ----
        y1 = jnp.dot(w1, h1, preferred_element_type=jnp.float32)   # (Cint, S)

        # ---- BN2 + ReLU ----
        a = jnp.maximum(y1 * s2 + b2, 0.0)                        # (Cint, S)

        # ---- 3x3 conv, stride 1, padding 1 ----
        # Each tap (dy, dx) is a lane rotation of the flat slab (XLU, cheap);
        # zero padding / row-wrap is handled by precomputed 0/1 masks (VPU,
        # full lane width).  Taps are stacked along sublanes (aligned) and fed
        # to a single MXU dot with K = 9*Cint.
        taps = []
        for dy in range(3):
            for dx in range(3):
                off = (dy - 1) * width + (dx - 1)
                if off == 0:
                    taps.append(a)                       # centre tap: no shift, mask == 1
                else:
                    shifted = pltpu.roll(a, (-off) % S, axis=1)
                    t = dy * 3 + dx
                    taps.append(shifted * masks[t:t + 1, :])
        im2col = jnp.concatenate(taps, axis=0)                    # (9*Cint, S)
        y2 = jnp.dot(w2, im2col, preferred_element_type=jnp.float32)  # (Cout, S)

        # ---- fused channel concat: lane-dense stores of [x | conv_out] rows ----
        out_ref[b, 0:Cin, :] = xb
        out_ref[b, Cin:Cin + Cout, :] = y2


def _tap_masks(H, W):
    """(9, H*W) f32 masks: 1 where 3x3 tap (dy, dx) falls inside the image."""
    hh, ww = np.meshgrid(np.arange(H), np.arange(W), indexing="ij")
    rows = []
    for dy in range(3):
        for dx in range(3):
            valid = ((hh + dy - 1 >= 0) & (hh + dy - 1 < H) &
                     (ww + dx - 1 >= 0) & (ww + dx - 1 < W))
            rows.append(valid.reshape(-1))
    return jnp.asarray(np.stack(rows).astype(np.float32))


def _working_set_bytes(B_blk, Cin, Cint, Cout, S):
    f32 = 4
    io_blocks = 2 * B_blk * (2 * Cin + Cout) * S * f32          # double-buffered x + out tiles
    const_blocks = 2 * (9 * S + Cin * Cint + 9 * Cint * Cout
                        + 2 * Cin + 2 * Cint) * f32              # masks + weights + BN params
    temps = (Cin + Cint + 2 * 9 * Cint + Cout) * S * f32         # in-kernel temporaries / image
    return io_blocks + const_blocks + B_blk * temps


def _choose_batch_block(N, Cin, Cint, Cout, S, budget=24 * 2**20):
    """Largest per-step batch that fits a v7x-safe working set and keeps >= 2 grid
    steps (so both v7x TensorCores get work when N >= 2)."""
    best = 1
    for b in range(1, min(N, 8) + 1):
        if N % b != 0:
            continue
        if N >= 2 and (N // b) < 2:
            continue
        if _working_set_bytes(b, Cin, Cint, Cout, S) <= budget:
            best = b
    return best


def _vmem_limit_bytes(B_blk, Cin, Cint, Cout, S):
    try:   # 128 MiB on v5e/v6e, 64 MiB per TensorCore on v7x
        cap = int(pltpu.get_tpu_info().vmem_capacity_bytes)
    except Exception:
        cap = 64 * 2**20                      # conservative (v7x-safe) fallback
    want = 4 * _working_set_bytes(B_blk, Cin, Cint, Cout, S)   # generous headroom
    return int(min(0.75 * cap, max(16 * 2**20, want)))


def bottleneck_block(x_nchw, params, *, batch_block=None):
    """BottleneckBlock forward: (N, Cin, H, W) -> (N, Cin + Cout, H, W).

    NCHW is the kernel's native layout (channels on sublanes, H*W on lanes), so
    this wrapper only performs free row-major reshapes — no HBM transposes.
    """
    N, Cin, H, W = x_nchw.shape
    S = H * W
    Cint = params["w1"].shape[0]
    Cout = params["w2"].shape[0]
    Ct = Cin + Cout

    if batch_block is None:
        batch_block = _choose_batch_block(N, Cin, Cint, Cout, S)
    assert N % batch_block == 0
    grid = (N // batch_block,)

    x_flat = x_nchw.reshape(N, Cin, S)          # free row-major reshape
    masks = _tap_masks(H, W)

    flops = 2 * N * S * (Cin * Cint + 9 * Cint * Cout) + 4 * N * S * (Cin + Cint)
    bytes_accessed = 4 * (N * S * (Cin + Ct) + 9 * S + Cin * Cint
                          + 9 * Cint * Cout + 2 * (Cin + Cint))

    out_flat = pl.pallas_call(
        functools.partial(_bottleneck_kernel, width=W),
        out_shape=jax.ShapeDtypeStruct((N, Ct, S), jnp.float32),
        grid=grid,
        in_specs=[
            pl.BlockSpec((batch_block, Cin, S), lambda n: (n, 0, 0)),
            pl.BlockSpec((9, S), lambda n: (0, 0)),
            pl.BlockSpec((Cin, 1), lambda n: (0, 0)),
            pl.BlockSpec((Cin, 1), lambda n: (0, 0)),
            pl.BlockSpec((Cint, Cin), lambda n: (0, 0)),
            pl.BlockSpec((Cint, 1), lambda n: (0, 0)),
            pl.BlockSpec((Cint, 1), lambda n: (0, 0)),
            pl.BlockSpec((Cout, 9 * Cint), lambda n: (0, 0)),
        ],
        out_specs=pl.BlockSpec((batch_block, Ct, S), lambda n: (n, 0, 0)),
        compiler_params=pltpu.CompilerParams(
            dimension_semantics=("parallel",),
            vmem_limit_bytes=_vmem_limit_bytes(batch_block, Cin, Cint, Cout, S)),
        cost_estimate=pl.CostEstimate(flops=int(flops), transcendentals=0,
                                      bytes_accessed=int(bytes_accessed)),
    )(x_flat, masks, params["s1"], params["b1"], params["w1"],
      params["s2"], params["b2"], params["w2"])

    return out_flat.reshape(N, Ct, H, W)        # free row-major reshape


def _fold_bn(gamma, beta, mean, var, eps=1e-5):
    scale = gamma / jnp.sqrt(var + eps)
    shift = beta - mean * scale
    return scale, shift


def make_params(in_planes, out_planes, key):
    inter_planes = in_planes * 2
    k1, k2 = jax.random.split(key)

    # Deterministic BN parameters (synthetic, non-trivial).
    def bn_params(c, offset):
        idx = jnp.arange(c, dtype=jnp.float32) + offset
        gamma = 0.8 + 0.05 * idx
        beta = 0.02 * idx - 0.1
        mean = 0.01 * idx
        var = 1.0 + 0.1 * idx
        return _fold_bn(gamma, beta, mean, var)

    s1, b1 = bn_params(in_planes, 0.0)
    s2, b2 = bn_params(inter_planes, 1.0)

    # Conv weights (PyTorch OIHW), converted once to kernel-friendly layouts.
    w1_oihw = 0.1 * jax.random.normal(k1, (inter_planes, in_planes, 1, 1),
                                      dtype=jnp.float32)
    w2_oihw = 0.1 * jax.random.normal(k2, (out_planes, inter_planes, 3, 3),
                                      dtype=jnp.float32)

    params = {
        "s1": s1.reshape(in_planes, 1),
        "b1": b1.reshape(in_planes, 1),
        "w1": w1_oihw[:, :, 0, 0],                                   # (Cint, Cin)
        "s2": s2.reshape(inter_planes, 1),
        "b2": b2.reshape(inter_planes, 1),
        # (o, dy, dx, ci) row-major -> (Cout, 9*Cint); matches kernel tap order.
        "w2": jnp.transpose(w2_oihw, (0, 2, 3, 1))
                 .reshape(out_planes, 9 * inter_planes),
    }
    return params, (w1_oihw, w2_oihw, s1, b1, s2, b2)


def reference(x_nchw, w1_oihw, w2_oihw, s1, b1, s2, b2):
    # Pure f32 reference (the kernel is f32 end-to-end now).
    h = jnp.maximum(x_nchw * s1[None, :, None, None] + b1[None, :, None, None], 0.0)
    y1 = jax.lax.conv_general_dilated(
        h, w1_oihw, window_strides=(1, 1), padding="VALID",
        dimension_numbers=("NCHW", "OIHW", "NCHW"),
        precision=jax.lax.Precision.HIGHEST)
    h2 = jnp.maximum(y1 * s2[None, :, None, None] + b2[None, :, None, None], 0.0)
    y2 = jax.lax.conv_general_dilated(
        h2, w2_oihw, window_strides=(1, 1), padding="SAME",
        dimension_numbers=("NCHW", "OIHW", "NCHW"),
        precision=jax.lax.Precision.HIGHEST)
    return jnp.concatenate([x_nchw, y2], axis=1)


if __name__ == "__main__":
    key = jax.random.PRNGKey(0)
    kx, kp = jax.random.split(key)

    in_planes, out_planes = 4, 8
    N, H, W = 2, 16, 16

    x = jax.random.normal(kx, (N, in_planes, H, W), dtype=jnp.float32)
    params, raw = make_params(in_planes, out_planes, kp)

    out = jax.jit(bottleneck_block)(x, params)
    out = jax.block_until_ready(out)

    ref = reference(x, *raw)
    assert out.shape == (N, in_planes + out_planes, H, W), out.shape
    # Kernel math is f32; loose tolerance only covers possible MXU f32 pass
    # reduction on some parts.
    np.testing.assert_allclose(np.asarray(out), np.asarray(ref),
                               rtol=1e-2, atol=1e-2)
    print("KERNEL_OK")
</pallas_src>

<mosaic_0001>
module attributes {stable_mosaic.version = 11 : i64} {
  func.func @_bottleneck_kernel(%arg0: i32, %arg1: memref<1x4x256xf32, #tpu.memory_space<vmem>>, %arg2: memref<9x256xf32, #tpu.memory_space<vmem>>, %arg3: memref<4x1xf32, #tpu.memory_space<vmem>>, %arg4: memref<4x1xf32, #tpu.memory_space<vmem>>, %arg5: memref<8x4xf32, #tpu.memory_space<vmem>>, %arg6: memref<8x1xf32, #tpu.memory_space<vmem>>, %arg7: memref<8x1xf32, #tpu.memory_space<vmem>>, %arg8: memref<8x72xf32, #tpu.memory_space<vmem>>, %arg9: memref<1x12x256xf32, #tpu.memory_space<vmem>>) attributes {dimension_semantics = [#tpu.dimension_semantics<parallel>], iteration_bounds = array<i64: 2>, scalar_prefetch = 0 : i64, scratch_operands = 0 : i64, tpu.core_type = #tpu.core_type<tc>, window_params = [{transform_indices = @transform_0, window_bounds = array<i64: 1, 4, 256>}, {pipeline_mode = #tpu.pipeline_mode<synchronous>, transform_indices = @transform_1, window_bounds = array<i64: 9, 256>}, {pipeline_mode = #tpu.pipeline_mode<synchronous>, transform_indices = @transform_2, window_bounds = array<i64: 4, 1>}, {pipeline_mode = #tpu.pipeline_mode<synchronous>, transform_indices = @transform_3, window_bounds = array<i64: 4, 1>}, {pipeline_mode = #tpu.pipeline_mode<synchronous>, transform_indices = @transform_4, window_bounds = array<i64: 8, 4>}, {pipeline_mode = #tpu.pipeline_mode<synchronous>, transform_indices = @transform_5, window_bounds = array<i64: 8, 1>}, {pipeline_mode = #tpu.pipeline_mode<synchronous>, transform_indices = @transform_6, window_bounds = array<i64: 8, 1>}, {pipeline_mode = #tpu.pipeline_mode<synchronous>, transform_indices = @transform_7, window_bounds = array<i64: 8, 72>}, {transform_indices = @transform_8, window_bounds = array<i64: 1, 12, 256>}]} {
    %c0 = arith.constant 0 : index
    %c0_0 = arith.constant 0 : index
    %0 = vector.load %arg5[%c0, %c0_0] : memref<8x4xf32, #tpu.memory_space<vmem>>, vector<8x4xf32>
    %c0_1 = arith.constant 0 : index
    %c0_2 = arith.constant 0 : index
    %1 = vector.load %arg8[%c0_1, %c0_2] : memref<8x72xf32, #tpu.memory_space<vmem>>, vector<8x72xf32>
    %c0_3 = arith.constant 0 : index
    %c0_4 = arith.constant 0 : index
    %2 = vector.load %arg3[%c0_3, %c0_4] : memref<4x1xf32, #tpu.memory_space<vmem>>, vector<4x1xf32>
    %c0_5 = arith.constant 0 : index
    %c0_6 = arith.constant 0 : index
    %3 = vector.load %arg4[%c0_5, %c0_6] : memref<4x1xf32, #tpu.memory_space<vmem>>, vector<4x1xf32>
    %c0_7 = arith.constant 0 : index
    %c0_8 = arith.constant 0 : index
    %4 = vector.load %arg6[%c0_7, %c0_8] : memref<8x1xf32, #tpu.memory_space<vmem>>, vector<8x1xf32>
    %c0_9 = arith.constant 0 : index
    %c0_10 = arith.constant 0 : index
    %5 = vector.load %arg7[%c0_9, %c0_10] : memref<8x1xf32, #tpu.memory_space<vmem>>, vector<8x1xf32>
    %c0_11 = arith.constant 0 : index
    %c0_12 = arith.constant 0 : index
    %6 = vector.load %arg2[%c0_11, %c0_12] : memref<9x256xf32, #tpu.memory_space<vmem>>, vector<9x256xf32>
    %c0_13 = arith.constant 0 : index
    %c0_14 = arith.constant 0 : index
    %c0_15 = arith.constant 0 : index
    %7 = vector.load %arg1[%c0_13, %c0_14, %c0_15] : memref<1x4x256xf32, #tpu.memory_space<vmem>>, vector<1x4x256xf32>
    %8 = vector.shape_cast %7 : vector<1x4x256xf32> to vector<4x256xf32>
    %9 = vector.broadcast %2 : vector<4x1xf32> to vector<4x256xf32>
    %10 = arith.mulf %8, %9 : vector<4x256xf32>
    %11 = vector.broadcast %3 : vector<4x1xf32> to vector<4x256xf32>
    %12 = arith.addf %10, %11 : vector<4x256xf32>
    %cst = arith.constant 0.000000e+00 : f32
    %13 = vector.broadcast %cst : f32 to vector<4x256xf32>
    %14 = arith.maximumf %12, %13 : vector<4x256xf32>
    %cst_16 = arith.constant dense<0.000000e+00> : vector<8x256xf32>
    %15 = tpu.matmul %0, %14, %cst_16 {dimension_numbers = #tpu.dot_dimension_numbers<[1], [0], [0], [1], [0, 0, 1, 1], [], []>} : vector<8x4xf32>, vector<4x256xf32>, vector<8x256xf32> -> vector<8x256xf32>
    %16 = vector.broadcast %4 : vector<8x1xf32> to vector<8x256xf32>
    %17 = arith.mulf %15, %16 : vector<8x256xf32>
    %18 = vector.broadcast %5 : vector<8x1xf32> to vector<8x256xf32>
    %19 = arith.addf %17, %18 : vector<8x256xf32>
    %cst_17 = arith.constant 0.000000e+00 : f32
    %20 = vector.broadcast %cst_17 : f32 to vector<8x256xf32>
    %21 = arith.maximumf %19, %20 : vector<8x256xf32>
    %c17_i32 = arith.constant 17 : i32
    %22 = tpu.dynamic_rotate %21 by %c17_i32 dim 1 : vector<8x256xf32>, i32 -> vector<8x256xf32>
    %23 = vector.extract_strided_slice %6 {offsets = [0, 0], sizes = [1, 256], strides = [1, 1]} : vector<9x256xf32> to vector<1x256xf32>
    %24 = vector.broadcast %23 : vector<1x256xf32> to vector<8x256xf32>
    %25 = arith.mulf %22, %24 : vector<8x256xf32>
    %c16_i32 = arith.constant 16 : i32
    %26 = tpu.dynamic_rotate %21 by %c16_i32 dim 1 : vector<8x256xf32>, i32 -> vector<8x256xf32>
    %27 = vector.extract_strided_slice %6 {offsets = [1, 0], sizes = [1, 256], strides = [1, 1]} : vector<9x256xf32> to vector<1x256xf32>
    %28 = vector.broadcast %27 : vector<1x256xf32> to vector<8x256xf32>
    %29 = arith.mulf %26, %28 : vector<8x256xf32>
    %c15_i32 = arith.constant 15 : i32
    %30 = tpu.dynamic_rotate %21 by %c15_i32 dim 1 : vector<8x256xf32>, i32 -> vector<8x256xf32>
    %31 = vector.extract_strided_slice %6 {offsets = [2, 0], sizes = [1, 256], strides = [1, 1]} : vector<9x256xf32> to vector<1x256xf32>
    %32 = vector.broadcast %31 : vector<1x256xf32> to vector<8x256xf32>
    %33 = arith.mulf %30, %32 : vector<8x256xf32>
    %c1_i32 = arith.constant 1 : i32
    %34 = tpu.dynamic_rotate %21 by %c1_i32 dim 1 : vector<8x256xf32>, i32 -> vector<8x256xf32>
    %35 = vector.extract_strided_slice %6 {offsets = [3, 0], sizes = [1, 256], strides = [1, 1]} : vector<9x256xf32> to vector<1x256xf32>
    %36 = vector.broadcast %35 : vector<1x256xf32> to vector<8x256xf32>
    %37 = arith.mulf %34, %36 : vector<8x256xf32>
    %c255_i32 = arith.constant 255 : i32
    %38 = tpu.dynamic_rotate %21 by %c255_i32 dim 1 : vector<8x256xf32>, i32 -> vector<8x256xf32>
    %39 = vector.extract_strided_slice %6 {offsets = [5, 0], sizes = [1, 256], strides = [1, 1]} : vector<9x256xf32> to vector<1x256xf32>
    %40 = vector.broadcast %39 : vector<1x256xf32> to vector<8x256xf32>
    %41 = arith.mulf %38, %40 : vector<8x256xf32>
    %c241_i32 = arith.constant 241 : i32
    %42 = tpu.dynamic_rotate %21 by %c241_i32 dim 1 : vector<8x256xf32>, i32 -> vector<8x256xf32>
    %43 = vector.extract_strided_slice %6 {offsets = [6, 0], sizes = [1, 256], strides = [1, 1]} : vector<9x256xf32> to vector<1x256xf32>
    %44 = vector.broadcast %43 : vector<1x256xf32> to vector<8x256xf32>
    %45 = arith.mulf %42, %44 : vector<8x256xf32>
    %c240_i32 = arith.constant 240 : i32
    %46 = tpu.dynamic_rotate %21 by %c240_i32 dim 1 : vector<8x256xf32>, i32 -> vector<8x256xf32>
    %47 = vector.extract_strided_slice %6 {offsets = [7, 0], sizes = [1, 256], strides = [1, 1]} : vector<9x256xf32> to vector<1x256xf32>
    %48 = vector.broadcast %47 : vector<1x256xf32> to vector<8x256xf32>
    %49 = arith.mulf %46, %48 : vector<8x256xf32>
    %c239_i32 = arith.constant 239 : i32
    %50 = tpu.dynamic_rotate %21 by %c239_i32 dim 1 : vector<8x256xf32>, i32 -> vector<8x256xf32>
    %51 = vector.extract_strided_slice %6 {offsets = [8, 0], sizes = [1, 256], strides = [1, 1]} : vector<9x256xf32> to vector<1x256xf32>
    %52 = vector.broadcast %51 : vector<1x256xf32> to vector<8x256xf32>
    %53 = arith.mulf %50, %52 : vector<8x256xf32>
    %54 = tpu.concatenate %25, %29, %33, %37, %21, %41, %45, %49, %53 in 0 : vector<8x256xf32>, vector<8x256xf32>, vector<8x256xf32>, vector<8x256xf32>, vector<8x256xf32>, vector<8x256xf32>, vector<8x256xf32>, vector<8x256xf32>, vector<8x256xf32> -> vector<72x256xf32>
    %cst_18 = arith.constant dense<0.000000e+00> : vector<8x256xf32>
    %55 = tpu.matmul %1, %54, %cst_18 {dimension_numbers = #tpu.dot_dimension_numbers<[1], [0], [0], [1], [0, 0, 1, 1], [], []>} : vector<8x72xf32>, vector<72x256xf32>, vector<8x256xf32> -> vector<8x256xf32>
    %c0_19 = arith.constant 0 : index
    %c0_20 = arith.constant 0 : index
    %c0_21 = arith.constant 0 : index
    %56 = vector.load %arg9[%c0_19, %c0_20, %c0_21] : memref<1x12x256xf32, #tpu.memory_space<vmem>>, vector<1x4x256xf32>
    %57 = vector.shape_cast %56 : vector<1x4x256xf32> to vector<4x256xf32>
    %58 = vector.shape_cast %8 : vector<4x256xf32> to vector<1x4x256xf32>
    tpu.vector_store %arg9[%c0_19, %c0_20, %c0_21], %58 {strides = array<i32>} : memref<1x12x256xf32, #tpu.memory_space<vmem>>, vector<1x4x256xf32>,
    %c0_22 = arith.constant 0 : index
    %c4 = arith.constant 4 : index
    %c0_23 = arith.constant 0 : index
    %59 = vector.load %arg9[%c0_22, %c4, %c0_23] : memref<1x12x256xf32, #tpu.memory_space<vmem>>, vector<1x8x256xf32>
    %60 = vector.shape_cast %59 : vector<1x8x256xf32> to vector<8x256xf32>
    %61 = vector.shape_cast %55 : vector<8x256xf32> to vector<1x8x256xf32>
    tpu.vector_store %arg9[%c0_22, %c4, %c0_23], %61 {strides = array<i32>} : memref<1x12x256xf32, #tpu.memory_space<vmem>>, vector<1x8x256xf32>,
    return
  }
  func.func @transform_0(%arg0: i32) -> (i32, i32, i32) {
    %c0_i32 = arith.constant 0 : i32
    %c0_i32_0 = arith.constant 0 : i32
    %c0_i32_1 = arith.constant 0 : i32
    return %arg0, %c0_i32, %c0_i32_0 : i32, i32, i32
  }
  func.func @transform_1(%arg0: i32) -> (i32, i32) {
    %c0_i32 = arith.constant 0 : i32
    %c0_i32_0 = arith.constant 0 : i32
    %c0_i32_1 = arith.constant 0 : i32
    return %c0_i32, %c0_i32_0 : i32, i32
  }
  func.func @transform_2(%arg0: i32) -> (i32, i32) {
    %c0_i32 = arith.constant 0 : i32
    %c0_i32_0 = arith.constant 0 : i32
    %c0_i32_1 = arith.constant 0 : i32
    return %c0_i32, %c0_i32_0 : i32, i32
  }
  func.func @transform_3(%arg0: i32) -> (i32, i32) {
    %c0_i32 = arith.constant 0 : i32
    %c0_i32_0 = arith.constant 0 : i32
    %c0_i32_1 = arith.constant 0 : i32
    return %c0_i32, %c0_i32_0 : i32, i32
  }
  func.func @transform_4(%arg0: i32) -> (i32, i32) {
    %c0_i32 = arith.constant 0 : i32
    %c0_i32_0 = arith.constant 0 : i32
    %c0_i32_1 = arith.constant 0 : i32
    return %c0_i32, %c0_i32_0 : i32, i32
  }
  func.func @transform_5(%arg0: i32) -> (i32, i32) {
    %c0_i32 = arith.constant 0 : i32
    %c0_i32_0 = arith.constant 0 : i32
    %c0_i32_1 = arith.constant 0 : i32
    return %c0_i32, %c0_i32_0 : i32, i32
  }
  func.func @transform_6(%arg0: i32) -> (i32, i32) {
    %c0_i32 = arith.constant 0 : i32
    %c0_i32_0 = arith.constant 0 : i32
    %c0_i32_1 = arith.constant 0 : i32
    return %c0_i32, %c0_i32_0 : i32, i32
  }
  func.func @transform_7(%arg0: i32) -> (i32, i32) {
    %c0_i32 = arith.constant 0 : i32
    %c0_i32_0 = arith.constant 0 : i32
    %c0_i32_1 = arith.constant 0 : i32
    return %c0_i32, %c0_i32_0 : i32, i32
  }
  func.func @transform_8(%arg0: i32) -> (i32, i32, i32) {
    %c0_i32 = arith.constant 0 : i32
    %c0_i32_0 = arith.constant 0 : i32
    %c0_i32_1 = arith.constant 0 : i32
    return %arg0, %c0_i32, %c0_i32_0 : i32, i32, i32
  }
}

</mosaic_0001>

<llo_original>
// kernel: bottleneck_block.1
$region0: #{bottleneck_block.1}
  #allocation0 [shape = 'u32[]', space=smem, size = 0x4, offset = 0x4, fixed_abs, tag = 'smem constant byte address 0x4 - core index']
  #allocation1 [shape = 'u32[72,128]{1,0:T(1,128)}', space=vmem, size = 0x9000, scoped, tag = 'internal scratch']
  %s0 = inlined_call_operand.vmem [shape: f32[2,4,256], index: 0, kind: input, shape index: {}]
  %s1 = inlined_call_operand.vmem [shape: f32[9,256], index: 1, kind: input, shape index: {}]
  %s2 = inlined_call_operand.vmem [shape: f32[4,1], index: 2, kind: input, shape index: {}]
  %s3 = inlined_call_operand.vmem [shape: f32[4,1], index: 3, kind: input, shape index: {}]
  %s4 = inlined_call_operand.vmem [shape: f32[8,4], index: 4, kind: input, shape index: {}]
  %s5 = inlined_call_operand.vmem [shape: f32[8,1], index: 5, kind: input, shape index: {}]
  %s6 = inlined_call_operand.vmem [shape: f32[8,1], index: 6, kind: input, shape index: {}]
  %s7 = inlined_call_operand.vmem [shape: f32[8,72], index: 7, kind: input, shape index: {}]
  %s8 = inlined_call_operand.vmem [shape: f32[2,12,256], index: 8, kind: output, shape index: {}]
  %s9 = sld [smem:[#allocation0]]
  $region65: #{bottleneck_block.1} parent=0
    _
  %s11 = ssub.s32 1, %s9
  %s12 = scalar_select 0, %s11, %s9
  loop: start=0, step=1, limit=4
  $region2: #{bottleneck_block.1} parent=0 // loop_pre_header
    _
  $region3: #{bottleneck_block.1} parent=0 // loop_header
    %s14 = sphi 0, %s18
    %p15 = scmp.ge.s32.totalorder %s14, 4
    %s24 = sphi 0, %s26
    %s27 = sphi 0, %s24
    %s28 = sphi 0, %s27
    %s44 = sphi 0, %s28
    %s48 = sphi 0, %s48
    %s50 = sphi 0, %s48
    %s51 = sphi 0, %s50
    %s65 = sphi 0, %s51
    %s69 = sphi 0, %s69
    %s71 = sphi 0, %s69
    %s72 = sphi 0, %s71
    %s86 = sphi 0, %s72
    %s90 = sphi 0, %s90
    %s92 = sphi 0, %s90
    %s93 = sphi 0, %s92
    %s107 = sphi 0, %s93
    %s111 = sphi 0, %s111
    %s113 = sphi 0, %s111
    %s114 = sphi 0, %s113
    %s128 = sphi 0, %s114
    %s132 = sphi 0, %s132
    %s134 = sphi 0, %s132
    %s135 = sphi 0, %s134
    %s149 = sphi 0, %s135
    %s153 = sphi 0, %s153
    %s155 = sphi 0, %s153
    %s156 = sphi 0, %s155
    %s170 = sphi 0, %s156
    %s174 = sphi 0, %s174
    %s176 = sphi 0, %s174
    %s177 = sphi 0, %s176
    %s191 = sphi 0, %s177
    %s197 = sphi 0, %s199
    %s200 = sphi 0, %s197
    %s201 = sphi 0, %s200
    %s217 = sphi 0, %s201
  $region4: #{bottleneck_block.1} parent=0 // loop_header_branch
    %17 = sbr.rel (%p15) target = $region8
  $region5: #{bottleneck_block.1} parent=0 // loop_body
    %s19 = ssub.s32 %s14, 1
    %s20 = ssub.s32 %s14, 2
    %s21 = sadd.s32 %s14, 1
    %s22 = ssub.s32 %s14, %s21
    %p23 = scmp.eq.s32.totalorder %s22, 0
    %s25 = sadd.s32 %s24, 1
    %s26 = scalar_select %p23, %s24, %s25
    %p29 = pneg %p23
    %p30 = scmp.eq.s32.totalorder %s14, 1
    %p31 = por %p29, %p30
    %p32 = scmp.ne.s32.totalorder %s24, %s27
    %p33 = scmp.eq.s32.totalorder %s14, 0
    %p34 = por %p32, %p33
    %p35 = scmp.ne.s32.totalorder %s24, %s27
    %p36 = scmp.eq.s32.totalorder %s19, 1
    %p37 = por %p35, %p36
    %p38 = scmp.ne.s32.totalorder %s27, %s28
    %p39 = scmp.eq.s32.totalorder %s19, 0
    %p40 = por %p38, %p39
    %p41 = scmp.ne.s32.totalorder %s27, %s28
    %p42 = scmp.eq.s32.totalorder %s20, 1
    %p43 = por %p41, %p42
    %p45 = scmp.ne.s32.totalorder %s28, %s44
    %p46 = scmp.eq.s32.totalorder %s20, 0
    %p47 = por %p45, %p46
    %s49 = sadd.s32 %s48, 1
    %p52 = scmp.eq.s32.totalorder %s14, 1
    %p53 = scmp.ne.s32.totalorder %s48, %s50
    %p54 = scmp.eq.s32.totalorder %s14, 0
    %p55 = por %p53, %p54
    %p56 = scmp.ne.s32.totalorder %s48, %s50
    %p57 = scmp.eq.s32.totalorder %s19, 1
    %p58 = por %p56, %p57
    %p59 = scmp.ne.s32.totalorder %s50, %s51
    %p60 = scmp.eq.s32.totalorder %s19, 0
    %p61 = por %p59, %p60
    %p62 = scmp.ne.s32.totalorder %s50, %s51
    %p63 = scmp.eq.s32.totalorder %s20, 1
    %p64 = por %p62, %p63
    %p66 = scmp.ne.s32.totalorder %s51, %s65
    %p67 = scmp.eq.s32.totalorder %s20, 0
    %p68 = por %p66, %p67
    %s70 = sadd.s32 %s69, 1
    %p73 = scmp.eq.s32.totalorder %s14, 1
    %p74 = scmp.ne.s32.totalorder %s69, %s71
    %p75 = scmp.eq.s32.totalorder %s14, 0
    %p76 = por %p74, %p75
    %p77 = scmp.ne.s32.totalorder %s69, %s71
    %p78 = scmp.eq.s32.totalorder %s19, 1
    %p79 = por %p77, %p78
    %p80 = scmp.ne.s32.totalorder %s71, %s72
    %p81 = scmp.eq.s32.totalorder %s19, 0
    %p82 = por %p80, %p81
    %p83 = scmp.ne.s32.totalorder %s71, %s72
    %p84 = scmp.eq.s32.totalorder %s20, 1
    %p85 = por %p83, %p84
    %p87 = scmp.ne.s32.totalorder %s72, %s86
    %p88 = scmp.eq.s32.totalorder %s20, 0
    %p89 = por %p87, %p88
    %s91 = sadd.s32 %s90, 1
    %p94 = scmp.eq.s32.totalorder %s14, 1
    %p95 = scmp.ne.s32.totalorder %s90, %s92
    %p96 = scmp.eq.s32.totalorder %s14, 0
    %p97 = por %p95, %p96
    %p98 = scmp.ne.s32.totalorder %s90, %s92
    %p99 = scmp.eq.s32.totalorder %s19, 1
    %p100 = por %p98, %p99
    %p101 = scmp.ne.s32.totalorder %s92, %s93
    %p102 = scmp.eq.s32.totalorder %s19, 0
    %p103 = por %p101, %p102
    %p104 = scmp.ne.s32.totalorder %s92, %s93
    %p105 = scmp.eq.s32.totalorder %s20, 1
    %p106 = por %p104, %p105
    %p108 = scmp.ne.s32.totalorder %s93, %s107
    %p109 = scmp.eq.s32.totalorder %s20, 0
    %p110 = por %p108, %p109
    %s112 = sadd.s32 %s111, 1
    %p115 = scmp.eq.s32.totalorder %s14, 1
    %p116 = scmp.ne.s32.totalorder %s111, %s113
    %p117 = scmp.eq.s32.totalorder %s14, 0
    %p118 = por %p116, %p117
    %p119 = scmp.ne.s32.totalorder %s111, %s113
    %p120 = scmp.eq.s32.totalorder %s19, 1
    %p121 = por %p119, %p120
    %p122 = scmp.ne.s32.totalorder %s113, %s114
    %p123 = scmp.eq.s32.totalorder %s19, 0
    %p124 = por %p122, %p123
    %p125 = scmp.ne.s32.totalorder %s113, %s114
    %p126 = scmp.eq.s32.totalorder %s20, 1
    %p127 = por %p125, %p126
    %p129 = scmp.ne.s32.totalorder %s114, %s128
    %p130 = scmp.eq.s32.totalorder %s20, 0
    %p131 = por %p129, %p130
    %s133 = sadd.s32 %s132, 1
    %p136 = scmp.eq.s32.totalorder %s14, 1
    %p137 = scmp.ne.s32.totalorder %s132, %s134
    %p138 = scmp.eq.s32.totalorder %s14, 0
    %p139 = por %p137, %p138
    %p140 = scmp.ne.s32.totalorder %s132, %s134
    %p141 = scmp.eq.s32.totalorder %s19, 1
    %p142 = por %p140, %p141
    %p143 = scmp.ne.s32.totalorder %s134, %s135
    %p144 = scmp.eq.s32.totalorder %s19, 0
    %p145 = por %p143, %p144
    %p146 = scmp.ne.s32.totalorder %s134, %s135
    %p147 = scmp.eq.s32.totalorder %s20, 1
    %p148 = por %p146, %p147
    %p150 = scmp.ne.s32.totalorder %s135, %s149
    %p151 = scmp.eq.s32.totalorder %s20, 0
    %p152 = por %p150, %p151
    %s154 = sadd.s32 %s153, 1
    %p157 = scmp.eq.s32.totalorder %s14, 1
    %p158 = scmp.ne.s32.totalorder %s153, %s155
    %p159 = scmp.eq.s32.totalorder %s14, 0
    %p160 = por %p158, %p159
    %p161 = scmp.ne.s32.totalorder %s153, %s155
    %p162 = scmp.eq.s32.totalorder %s19, 1
    %p163 = por %p161, %p162
    %p164 = scmp.ne.s32.totalorder %s155, %s156
    %p165 = scmp.eq.s32.totalorder %s19, 0
    %p166 = por %p164, %p165
    %p167 = scmp.ne.s32.totalorder %s155, %s156
    %p168 = scmp.eq.s32.totalorder %s20, 1
    %p169 = por %p167, %p168
    %p171 = scmp.ne.s32.totalorder %s156, %s170
    %p172 = scmp.eq.s32.totalorder %s20, 0
    %p173 = por %p171, %p172
    %s175 = sadd.s32 %s174, 1
    %p178 = scmp.eq.s32.totalorder %s14, 1
    %p179 = scmp.ne.s32.totalorder %s174, %s176
    %p180 = scmp.eq.s32.totalorder %s14, 0
    %p181 = por %p179, %p180
    %p182 = scmp.ne.s32.totalorder %s174, %s176
    %p183 = scmp.eq.s32.totalorder %s19, 1
    %p184 = por %p182, %p183
    %p185 = scmp.ne.s32.totalorder %s176, %s177
    %p186 = scmp.eq.s32.totalorder %s19, 0
    %p187 = por %p185, %p186
    %p188 = scmp.ne.s32.totalorder %s176, %s177
    %p189 = scmp.eq.s32.totalorder %s20, 1
    %p190 = por %p188, %p189
    %p192 = scmp.ne.s32.totalorder %s177, %s191
    %p193 = scmp.eq.s32.totalorder %s20, 0
    %p194 = por %p192, %p193
    %s195 = ssub.s32 %s14, %s21
    %p196 = scmp.eq.s32.totalorder %s195, 0
    %s198 = sadd.s32 %s197, 1
    %s199 = scalar_select %p196, %s197, %s198
    %p202 = pneg %p196
    %p203 = scmp.eq.s32.totalorder %s14, 1
    %p204 = por %p202, %p203
    %p205 = scmp.ne.s32.totalorder %s197, %s200
    %p206 = scmp.eq.s32.totalorder %s14, 0
    %p207 = por %p205, %p206
    %p208 = scmp.ne.s32.totalorder %s197, %s200
    %p209 = scmp.eq.s32.totalorder %s19, 1
    %p210 = por %p208, %p209
    %p211 = scmp.ne.s32.totalorder %s200, %s201
    %p212 = scmp.eq.s32.totalorder %s19, 0
    %p213 = por %p211, %p212
    %p214 = scmp.ne.s32.totalorder %s200, %s201
    %p215 = scmp.eq.s32.totalorder %s20, 1
    %p216 = por %p214, %p215
    %p218 = scmp.ne.s32.totalorder %s201, %s217
    %p219 = scmp.eq.s32.totalorder %s20, 0
    %p220 = por %p218, %p219
    %p221 = scmp.le.s32.totalorder 1, %s14
    %p222 = scmp.lt.s32.totalorder %s14, 3
    %p223 = pnand %p221, %p222
    %p224 = pneg %p223
    // Predicated region
    $region9: #{bottleneck_block.1} parent=5 // pred_check
      _
    $region10: #{bottleneck_block.1} parent=5 // pred_check_branch
      %226 = sbr.rel (%p223) target = $region12
    $region11: #{bottleneck_block.1} parent=5 // pred_region
      %s227 = ssub.s32 %s14, 1
      // Predicated region
      $region13: #{bottleneck_block.1} parent=11 // pred_check
        %p228 = pneg %p61
      $region14: #{bottleneck_block.1} parent=11 // pred_check_branch
        %230 = sbr.rel (%p228) target = $region16
      $region15: #{bottleneck_block.1} parent=11 // pred_region
        _
      $region16: #{bottleneck_block.1} parent=11 // pred_fallthru
        _
      // Predicated region
      $region17: #{bottleneck_block.1} parent=11 // pred_check
        %p231 = pneg %p82
      $region18: #{bottleneck_block.1} parent=11 // pred_check_branch
        %233 = sbr.rel (%p231) target = $region20
      $region19: #{bottleneck_block.1} parent=11 // pred_region
        _
      $region20: #{bottleneck_block.1} parent=11 // pred_fallthru
        _
      // Predicated region
      $region21: #{bottleneck_block.1} parent=11 // pred_check
        %p234 = pneg %p103
      $region22: #{bottleneck_block.1} parent=11 // pred_check_branch
        %236 = sbr.rel (%p234) target = $region24
      $region23: #{bottleneck_block.1} parent=11 // pred_region
        _
      $region24: #{bottleneck_block.1} parent=11 // pred_fallthru
        _
      // Predicated region
      $region25: #{bottleneck_block.1} parent=11 // pred_check
        %p237 = pneg %p124
      $region26: #{bottleneck_block.1} parent=11 // pred_check_branch
        %239 = sbr.rel (%p237) target = $region28
      $region27: #{bottleneck_block.1} parent=11 // pred_region
        _
      $region28: #{bottleneck_block.1} parent=11 // pred_fallthru
        _
      // Predicated region
      $region29: #{bottleneck_block.1} parent=11 // pred_check
        %p240 = pneg %p145
      $region30: #{bottleneck_block.1} parent=11 // pred_check_branch
        %242 = sbr.rel (%p240) target = $region32
      $region31: #{bottleneck_block.1} parent=11 // pred_region
        _
      $region32: #{bottleneck_block.1} parent=11 // pred_fallthru
        _
      // Predicated region
      $region33: #{bottleneck_block.1} parent=11 // pred_check
        %p243 = pneg %p166
      $region34: #{bottleneck_block.1} parent=11 // pred_check_branch
        %245 = sbr.rel (%p243) target = $region36
      $region35: #{bottleneck_block.1} parent=11 // pred_region
        _
      $region36: #{bottleneck_block.1} parent=11 // pred_fallthru
        _
      // Predicated region
      $region37: #{bottleneck_block.1} parent=11 // pred_check
        %p246 = pneg %p187
      $region38: #{bottleneck_block.1} parent=11 // pred_check_branch
        %248 = sbr.rel (%p246) target = $region40
      $region39: #{bottleneck_block.1} parent=11 // pred_region
        _
      $region40: #{bottleneck_block.1} parent=11 // pred_fallthru
        _
    $region12: #{bottleneck_block.1} parent=5 // pred_fallthru
      _
    %p249 = scmp.lt.s32.totalorder %s14, 2
    // Predicated region
    $region41: #{bottleneck_block.1} parent=5 // pred_check
      %p250 = pneg %p249
    $region42: #{bottleneck_block.1} parent=5 // pred_check_branch
      %252 = sbr.rel (%p250) target = $region44
    $region43: #{bottleneck_block.1} parent=5 // pred_region
      // Predicated region
      $region45: #{bottleneck_block.1} parent=43 // pred_check
        %p253 = pneg %p34
      $region46: #{bottleneck_block.1} parent=43 // pred_check_branch
        %255 = sbr.rel (%p253) target = $region48
      $region47: #{bottleneck_block.1} parent=43 // pred_region
        %p256 = scmp.lt.s32.totalorder %s14, 1
        %s257 = scalar_select %p256, %s14, 1
        %s258 = smul.addr %s257, 2
        %s259 = smul.addr %s258, 4
        %s260 = scalar_lea.vmem %s0, %s259
      $region48: #{bottleneck_block.1} parent=43 // pred_fallthru
        _
    $region44: #{bottleneck_block.1} parent=5 // pred_fallthru
      _
    %p261 = scmp.le.s32.totalorder 1, %s14
    %p262 = scmp.lt.s32.totalorder %s14, 3
    %p263 = pnand %p261, %p262
    %p264 = pneg %p263
    // Predicated region
    $region49: #{bottleneck_block.1} parent=5 // pred_check
      _
    $region50: #{bottleneck_block.1} parent=5 // pred_check_branch
      %266 = sbr.rel (%p263) target = $region52
    $region51: #{bottleneck_block.1} parent=5 // pred_region
      %s267 = ssub.s32 %s14, 1
      %p268 = scmp.lt.s32.totalorder %s19, 1
      %s269 = scalar_select %p268, %s19, 1
      %s270 = smul.addr %s269, 2
      %s271 = smul.addr %s270, 4
      %s272 = scalar_lea.vmem %s0, %s271
      %p273 = pneg %p40
      %p274 = pneg %p37
      %p275 = pneg %p61
      %p276 = pneg %p58
      %p277 = pneg %p82
      %p278 = pneg %p79
      %p279 = pneg %p103
      %p280 = pneg %p100
      %p281 = pneg %p124
      %p282 = pneg %p121
      %p283 = pneg %p145
      %p284 = pneg %p142
      %p285 = pneg %p166
      %p286 = pneg %p163
      %p287 = pneg %p187
      %p288 = pneg %p184
      %p289 = pneg %p213
      %p290 = pneg %p210
      %p291 = scmp.lt.s32.totalorder %s19, 1
      %s292 = scalar_select %p291, %s19, 1
      %s293 = smul.addr %s292, 4
      %s294 = smul.addr %s293, 8
      %s295 = scalar_lea.vmem %s8, %s294
      %p296 = scmp.lt.s32.totalorder %s19, 1
      %s297 = scalar_select %p296, %s19, 1
      %s298 = smul.addr %s297, 2
      %s299 = smul.addr %s298, 4
      %s300 = scalar_lea.vmem %s0, %s299
      %p301 = scmp.lt.s32.totalorder %s19, 1
      %s302 = scalar_select %p301, %s19, 1
      %s303 = smul.addr %s302, 4
      %s304 = smul.addr %s303, 8
      %s305 = scalar_lea.vmem %s8, %s304
      %v306 = vld [vmem:[%s4] sm:$0xff]
      %v307 = vld [vmem:[%s7] sm:$0xff]
      %v308 = vld [vmem:[%s2] sm:$0xf]
      %v309 = vld [vmem:[%s3] sm:$0xf]
      %v310 = vld [vmem:[%s5] sm:$0xff]
      %v311 = vld [vmem:[%s6] sm:$0xff]
      %v312 = vld [vmem:[%s1] sm:$0xff]
      %v313 = vld [vmem:[%s1 + $0x8] sm:$0xff]
      %v314 = vld [vmem:[%s1 + $0x10] sm:$0x1]
      %v315 = vld [vmem:[%s1 + $0x18] sm:$0x1]
      %v316 = vld [vmem:[%s300] sm:$0xff]
      %318 = vset.pattern.permute.xlu0 0
      %319 = vperm.xlu0 %318, %v308
      %v320 = vpop.permute.xlu0 %319
      %v322 = vunpack.c.l.s4 839922192
      %v323 = vunpack.c.0.s8 %v322
      %v324 = vperm.slane %v320, %v323
      %v326 = vmul.f32 %v316, %v324
      %328 = vset.pattern.permute.xlu0 0
      %329 = vperm.xlu0 %328, %v309
      %v330 = vpop.permute.xlu0 %329
      %v332 = vunpack.c.l.s4 839922192
      %v333 = vunpack.c.0.s8 %v332
      %v334 = vperm.slane %v330, %v333
      %v336 = vadd.f32 %v326, %v334
      %v337 = vmax.f32 %v336, 0.0
      %339 = vst [vmem:[#allocation1] ss:$2 sm:$0xff] %v337
      %v340 = vld.sshfl [vmem:[#allocation1] sm:$0xff pattern:$0x75316420]
      %v341 = vld.sshfl [vmem:[#allocation1 + $0x8] sm:$0xff pattern:$0x75316420]
      %vm342 = vcmask 31744
      %v344 = vsel %vm342, %v306, 0
      %vm346 = vcmask 1043456
      %v347 = vsel %vm346, %v340, 0
      %v349 = vsel %vm346, %v341, 0
      %351 = vmatpush.msra.mxu0 0.0
      %352 = vmatpush.msra.mxu0 0.0
      %353 = vmatpush.msra.mxu0 0.0
      %354 = vmatpush.msra.mxu0 0.0
      %355 = vmatpush.msra.mxu0 0.0
      %356 = vmatpush.msra.mxu0 0.0
      %357 = vmatpush.msra.mxu0 0.0
      %358 = vmatpush.msra.mxu0 0.0
      %359 = vmatpush.msra.mxu0 0.0
      %360 = vmatpush.msra.mxu0 0.0
      %361 = vmatpush.msra.mxu0 0.0
      %362 = vmatpush.msra.mxu0 0.0
      %363 = vmatpush.msra.mxu0 0.0
      %364 = vmatpush.msra.mxu0 0.0
      %365 = vmatpush.msra.mxu0 0.0
      %366 = vmatpush.msra.mxu0 %v347
      %367 = vmatmul.f32.gmra.mxu0 %v344
      %v368 = vpop.f32.mrf.mxu0
      %v369 = vadd.f32 0.0, %v368
      %370 = vdwg.mxu0
      %371 = vmatpush.msra.mxu0 0.0
      %372 = vmatpush.msra.mxu0 0.0
      %373 = vmatpush.msra.mxu0 0.0
      %374 = vmatpush.msra.mxu0 0.0
      %375 = vmatpush.msra.mxu0 0.0
      %376 = vmatpush.msra.mxu0 0.0
      %377 = vmatpush.msra.mxu0 0.0
      %378 = vmatpush.msra.mxu0 0.0
      %379 = vmatpush.msra.mxu0 0.0
      %380 = vmatpush.msra.mxu0 0.0
      %381 = vmatpush.msra.mxu0 0.0
      %382 = vmatpush.msra.mxu0 0.0
      %383 = vmatpush.msra.mxu0 0.0
      %384 = vmatpush.msra.mxu0 0.0
      %385 = vmatpush.msra.mxu0 0.0
      %386 = vmatpush.msra.mxu0 %v349
      %387 = vmatmul.f32.gmra.mxu0 %v344
      %v388 = vpop.f32.mrf.mxu0
      %v389 = vadd.f32 0.0, %v388
      %390 = vdwg.mxu0
      %392 = vset.pattern.permute.xlu0 0
      %393 = vperm.xlu0 %392, %v310
      %v394 = vpop.permute.xlu0 %393
      %v396 = vmul.f32 %v369, %v394
      %v397 = vmul.f32 %v389, %v394
      %399 = vset.pattern.permute.xlu0 0
      %400 = vperm.xlu0 %399, %v311
      %v401 = vpop.permute.xlu0 %400
      %v403 = vadd.f32 %v396, %v401
      %v404 = vadd.f32 %v397, %v401
      %v405 = vmax.f32 %v403, 0.0
      %v406 = vmax.f32 %v404, 0.0
      %407 = vrot.lane.b32.xlu0 %v405, 17
      %v408 = vpop.permute.xlu0 %407
      %409 = vrot.lane.b32.xlu0 %v406, 17
      %v410 = vpop.permute.xlu0 %409
      %v411 = vlaneseq
      %v412 = vand.u32 %v411, 127
      %vm413 = vcmp.lt.s32.totalorder %v412, 17
      %v414 = vsel %vm413, %v408, %v410
      %v415 = vsel %vm413, %v410, %v408
      %v416 = vperm.slane %v312, 0
      %v417 = vperm.slane %v313, 0
      %v418 = vmul.f32 %v415, %v416
      %v419 = vmul.f32 %v414, %v417
      %420 = vrot.lane.b32.xlu0 %v405, 16
      %v421 = vpop.permute.xlu0 %420
      %422 = vrot.lane.b32.xlu0 %v406, 16
      %v423 = vpop.permute.xlu0 %422
      %vm424 = vcmp.lt.s32.totalorder %v412, 16
      %v425 = vsel %vm424, %v421, %v423
      %v426 = vsel %vm424, %v423, %v421
      %v427 = vperm.slane %v312, 1
      %v428 = vperm.slane %v313, 1
      %v429 = vmul.f32 %v426, %v427
      %v430 = vmul.f32 %v425, %v428
      %431 = vrot.lane.b32.xlu0 %v405, 15
      %v432 = vpop.permute.xlu0 %431
      %433 = vrot.lane.b32.xlu0 %v406, 15
      %v434 = vpop.permute.xlu0 %433
      %vm435 = vcmp.lt.s32.totalorder %v412, 15
      %v436 = vsel %vm435, %v432, %v434
      %v437 = vsel %vm435, %v434, %v432
      %v438 = vperm.slane %v312, 2
      %v439 = vperm.slane %v313, 2
      %v440 = vmul.f32 %v437, %v438
      %v441 = vmul.f32 %v436, %v439
      %442 = vrot.lane.b32.xlu0 %v405, 1
      %v443 = vpop.permute.xlu0 %442
      %444 = vrot.lane.b32.xlu0 %v406, 1
      %v445 = vpop.permute.xlu0 %444
      %vm446 = vcmp.lt.s32.totalorder %v412, 1
      %v447 = vsel %vm446, %v443, %v445
      %v448 = vsel %vm446, %v445, %v443
      %v449 = vperm.slane %v312, 3
      %v450 = vperm.slane %v313, 3
      %v451 = vmul.f32 %v448, %v449
      %v452 = vmul.f32 %v447, %v450
      %453 = vrot.lane.b32.xlu0 %v405, 127
      %v454 = vpop.permute.xlu0 %453
      %455 = vrot.lane.b32.xlu0 %v406, 127
      %v456 = vpop.permute.xlu0 %455
      %vm457 = vcmp.lt.s32.totalorder %v412, 127
      %v458 = vsel %vm457, %v454, %v456
      %v459 = vsel %vm457, %v456, %v454
      %v460 = vperm.slane %v312, 5
      %v461 = vperm.slane %v313, 5
      %v462 = vmul.f32 %v458, %v460
      %v463 = vmul.f32 %v459, %v461
      %464 = vrot.lane.b32.xlu0 %v405, 113
      %v465 = vpop.permute.xlu0 %464
      %466 = vrot.lane.b32.xlu0 %v406, 113
      %v467 = vpop.permute.xlu0 %466
      %vm468 = vcmp.lt.s32.totalorder %v412, 113
      %v469 = vsel %vm468, %v465, %v467
      %v470 = vsel %vm468, %v467, %v465
      %v471 = vperm.slane %v312, 6
      %v472 = vperm.slane %v313, 6
      %v473 = vmul.f32 %v469, %v471
      %v474 = vmul.f32 %v470, %v472
      %475 = vrot.lane.b32.xlu0 %v405, 112
      %v476 = vpop.permute.xlu0 %475
      %477 = vrot.lane.b32.xlu0 %v406, 112
      %v478 = vpop.permute.xlu0 %477
      %vm479 = vcmp.lt.s32.totalorder %v412, 112
      %v480 = vsel %vm479, %v476, %v478
      %v481 = vsel %vm479, %v478, %v476
      %v482 = vperm.slane %v312, 7
      %v483 = vperm.slane %v313, 7
      %v484 = vmul.f32 %v480, %v482
      %v485 = vmul.f32 %v481, %v483
      %486 = vrot.lane.b32.xlu0 %v405, 111
      %v487 = vpop.permute.xlu0 %486
      %488 = vrot.lane.b32.xlu0 %v406, 111
      %v489 = vpop.permute.xlu0 %488
      %vm490 = vcmp.lt.s32.totalorder %v412, 111
      %v491 = vsel %vm490, %v487, %v489
      %v492 = vsel %vm490, %v489, %v487
      %v493 = vperm.slane %v314, 0
      %v494 = vperm.slane %v315, 0
      %v495 = vmul.f32 %v491, %v493
      %v496 = vmul.f32 %v492, %v494
      %vm497 = vcmask 588800
      %v499 = vsel %vm497, %v307, 0
      %501 = vmatpush.msra.mxu0 0.0
      %502 = vmatpush.msra.mxu0 0.0
      %503 = vmatpush.msra.mxu0 0.0
      %504 = vmatpush.msra.mxu0 0.0
      %505 = vmatpush.msra.mxu0 0.0
      %506 = vmatpush.msra.mxu0 0.0
      %507 = vmatpush.msra.mxu0 0.0
      %508 = vmatpush.msra.mxu0 %v495
      %509 = vmatpush.msra.mxu0 %v484
      %510 = vmatpush.msra.mxu0 %v473
      %511 = vmatpush.msra.mxu0 %v462
      %512 = vmatpush.msra.mxu0 %v405
      %513 = vmatpush.msra.mxu0 %v451
      %514 = vmatpush.msra.mxu0 %v440
      %515 = vmatpush.msra.mxu0 %v429
      %516 = vmatpush.msra.mxu0 %v418
      %517 = vmatmul.f32.gmra.mxu0 %v499
      %v518 = vpop.f32.mrf.mxu0
      %v519 = vadd.f32 0.0, %v518
      %520 = vdwg.mxu0
      %521 = vmatpush.msra.mxu0 0.0
      %522 = vmatpush.msra.mxu0 0.0
      %523 = vmatpush.msra.mxu0 0.0
      %524 = vmatpush.msra.mxu0 0.0
      %525 = vmatpush.msra.mxu0 0.0
      %526 = vmatpush.msra.mxu0 0.0
      %527 = vmatpush.msra.mxu0 0.0
      %528 = vmatpush.msra.mxu0 %v496
      %529 = vmatpush.msra.mxu0 %v485
      %530 = vmatpush.msra.mxu0 %v474
      %531 = vmatpush.msra.mxu0 %v463
      %532 = vmatpush.msra.mxu0 %v406
      %533 = vmatpush.msra.mxu0 %v452
      %534 = vmatpush.msra.mxu0 %v441
      %535 = vmatpush.msra.mxu0 %v430
      %536 = vmatpush.msra.mxu0 %v419
      %537 = vmatmul.f32.gmra.mxu0 %v499
      %v538 = vpop.f32.mrf.mxu0
      %v539 = vadd.f32 0.0, %v538
      %540 = vdwg.mxu0
      %542 = vst [vmem:[#allocation1] ss:$2 sm:$0xff] %v316
      %v543 = vld.sshfl [vmem:[#allocation1] sm:$0xff pattern:$0x75316420]
      %v544 = vld.sshfl [vmem:[#allocation1 + $0x8] sm:$0xff pattern:$0x75316420]
      %547 = vst [vmem:[%s305] sm:$0xf] %v543
      %548 = vst [vmem:[%s305 + $0x8] sm:$0xf] %v544
      %v551 = vrot.slane %v519, 4
      %v552 = vrot.slane %v539, 4
      %555 = vst [vmem:[%s305] sm:$0xf0] %v551
      %556 = vst [vmem:[%s305 + $0x8] sm:$0xf0] %v552
      %557 = vst [vmem:[%s305 + $0x10] sm:$0xf] %v551
      %558 = vst [vmem:[%s305 + $0x18] sm:$0xf] %v552
      %p559 = scmp.lt.s32.totalorder %s19, 1
      %s560 = scalar_select %p559, %s19, 1
      %s561 = smul.addr %s560, 4
      %s562 = smul.addr %s561, 8
      %s563 = scalar_lea.vmem %s8, %s562
      // Predicated region
      $region53: #{bottleneck_block.1} parent=51 // pred_check
        %p564 = pneg %p210
      $region54: #{bottleneck_block.1} parent=51 // pred_check_branch
        %566 = sbr.rel (%p564) target = $region56
      $region55: #{bottleneck_block.1} parent=51 // pred_region
        _
      $region56: #{bottleneck_block.1} parent=51 // pred_fallthru
        _
    $region52: #{bottleneck_block.1} parent=5 // pred_fallthru
      _
    %p567 = scmp.le.s32.totalorder 2, %s14
    // Predicated region
    $region57: #{bottleneck_block.1} parent=5 // pred_check
      %p568 = pneg %p567
    $region58: #{bottleneck_block.1} parent=5 // pred_check_branch
      %570 = sbr.rel (%p568) target = $region60
    $region59: #{bottleneck_block.1} parent=5 // pred_region
      %s571 = ssub.s32 %s14, 2
      // Predicated region
      $region61: #{bottleneck_block.1} parent=59 // pred_check
        %p572 = pneg %p216
      $region62: #{bottleneck_block.1} parent=59 // pred_check_branch
        %574 = sbr.rel (%p572) target = $region64
      $region63: #{bottleneck_block.1} parent=59 // pred_region
        %p575 = scmp.lt.s32.totalorder %s20, 1
        %s576 = scalar_select %p575, %s20, 1
        %s577 = smul.addr %s576, 4
        %s578 = smul.addr %s577, 8
        %s579 = scalar_lea.vmem %s8, %s578
      $region64: #{bottleneck_block.1} parent=59 // pred_fallthru
        _
    $region60: #{bottleneck_block.1} parent=5 // pred_fallthru
      _
  $region6: #{bottleneck_block.1} parent=0 // loop_footer
    %s18 = sadd.s32 1, %s14
  $region7: #{bottleneck_block.1} parent=0 // loop_footer_branch
    %13 = sbr.rel target = $region3
  $region8: #{bottleneck_block.1} parent=0 // loop_exit
    _

</llo_original>
